<compile_context>
chip_gen: v6e
topology: v6e:2x2x1
jax: 0.10.0
libtpu: 0.0.40
codegen_flags: <defaults>
</compile_context>

<pallas_src>
import functools

import jax
import jax.numpy as jnp
from jax.experimental import pallas as pl
from jax.experimental.pallas import tpu as pltpu


def ffn_kernel(x_ref, w1_ref, b1_ref, w2_ref, b2_ref, o_ref, h_ref, acc_ref):
    """One (tm, tf) step of the fused MLP.

    x_ref  : (tm, hidden)       activation tile (operand dtype)
    w1_ref : (hidden, tf)       first-layer weight chunk
    b1_ref : (1, tf)            first-layer bias chunk (f32)
    w2_ref : (tf, hidden)       second-layer weight chunk
    b2_ref : (1, hidden)        second-layer bias (f32)
    o_ref  : (tm, hidden)       output tile (written on last ff step)
    h_ref  : (tm, tf)  f32      explicit VMEM home for the intermediate
    acc_ref: (tm, hidden) f32   running accumulator over ff chunks
    """
    j = pl.program_id(1)

    @pl.when(j == 0)
    def _init():
        acc_ref[...] = jnp.zeros_like(acc_ref)

    # h = relu(x @ W1_chunk + b1_chunk), bias/ReLU in f32.
    h = jnp.dot(x_ref[...], w1_ref[...], preferred_element_type=jnp.float32)
    h_ref[...] = jnp.maximum(h + b1_ref[...], 0.0)

    # acc += h @ W2_chunk  (f32 accumulation on the MXU).
    acc_ref[...] += jnp.dot(h_ref[...].astype(w2_ref.dtype), w2_ref[...],
                            preferred_element_type=jnp.float32)

    @pl.when(j == pl.num_programs(1) - 1)
    def _store():
        o_ref[...] = (acc_ref[...] + b2_ref[...]).astype(o_ref.dtype)


def _round_up(x, m):
    return ((x + m - 1) // m) * m


def _pick_ff_tile(ff, preferred, granule=128):
    """Largest tile <= preferred that divides ff and is a multiple of `granule`;
    falls back to the full ff axis (single chunk) if no such divisor exists."""
    if ff <= preferred:
        return ff
    t = (preferred // granule) * granule
    while t >= granule:
        if ff % t == 0:
            return t
        t -= granule
    return ff


def feed_forward(x, w1, b1, w2, b2, *, tm=256, tf=512, compute_dtype=None,
                 vmem_limit_bytes=48 << 20):
    """x: (batch, seq, hidden) -> (batch, seq, hidden).

    Fused MLP: Linear(hidden->ff) -> ReLU -> Linear(ff->hidden).
    Dropout is treated as identity (eval mode).
    # TODO(synk): training-mode dropout (stochastic masking) not implemented;
    #             forward matches module.eval() semantics.

    compute_dtype: optional MXU operand dtype (e.g. jnp.bfloat16 on v6e/v7x);
                   accumulation, bias and ReLU stay in f32; output keeps x.dtype.
    """
    batch, seq, hidden = x.shape
    ff = w1.shape[1]
    out_dtype = x.dtype

    if compute_dtype is not None:
        x = x.astype(compute_dtype)
        w1 = w1.astype(compute_dtype)
        w2 = w2.astype(compute_dtype)
    # Biases stay f32 regardless of operand dtype.
    b1 = jnp.asarray(b1, jnp.float32).reshape(1, ff)
    b2 = jnp.asarray(b2, jnp.float32).reshape(1, hidden)

    M = batch * seq
    tm = min(tm, _round_up(M, 8))          # big M tile, but never bigger than needed
    m_pad = _round_up(M, tm)               # ragged M handled by padding + slice
    tf = _pick_ff_tile(ff, tf)             # ff-axis tile (multiple of 128 or full)

    x2d = x.reshape(M, hidden)
    if m_pad != M:
        x2d = jnp.pad(x2d, ((0, m_pad - M), (0, 0)))

    grid = (m_pad // tm, ff // tf)

    # Advisory cost hint for XLA's scheduler.
    flops = 4 * m_pad * hidden * ff        # two matmuls: 2*M*H*F each
    bytes_accessed = (
        x2d.size * x2d.dtype.itemsize
        + w1.size * w1.dtype.itemsize
        + w2.size * w2.dtype.itemsize
        + b1.size * b1.dtype.itemsize
        + b2.size * b2.dtype.itemsize
        + m_pad * hidden * jnp.dtype(out_dtype).itemsize
    )
    cost = pl.CostEstimate(flops=flops, transcendentals=0,
                           bytes_accessed=bytes_accessed)

    out = pl.pallas_call(
        ffn_kernel,
        out_shape=jax.ShapeDtypeStruct((m_pad, hidden), out_dtype),
        grid_spec=pltpu.PrefetchScalarGridSpec(
            num_scalar_prefetch=0,
            grid=grid,
            in_specs=[
                pl.BlockSpec((tm, hidden), lambda i, j: (i, 0)),   # x tile
                pl.BlockSpec((hidden, tf), lambda i, j: (0, j)),   # W1 chunk
                pl.BlockSpec((1, tf),      lambda i, j: (0, j)),   # b1 chunk
                pl.BlockSpec((tf, hidden), lambda i, j: (j, 0)),   # W2 chunk
                pl.BlockSpec((1, hidden),  lambda i, j: (0, 0)),   # b2
            ],
            out_specs=pl.BlockSpec((tm, hidden), lambda i, j: (i, 0)),
            scratch_shapes=[
                pltpu.VMEM((tm, tf), jnp.float32),       # intermediate h
                pltpu.VMEM((tm, hidden), jnp.float32),   # accumulator
            ],
        ),
        compiler_params=pltpu.CompilerParams(
            # M axis is independent (megacore-shardable); ff axis is a reduction.
            dimension_semantics=("parallel", "arbitrary"),
            vmem_limit_bytes=vmem_limit_bytes,
        ),
        cost_estimate=cost,
    )(x2d, w1, b1, w2, b2)

    if m_pad != M:
        out = out[:M]
    return out.reshape(batch, seq, hidden)


def init_params(key, hidden_dim, ff_dim, dtype=jnp.float32):
    """Deterministic init mimicking nn.Linear's uniform(-1/sqrt(fan_in), 1/sqrt(fan_in))."""
    k1, k2, k3, k4 = jax.random.split(key, 4)
    lim1 = 1.0 / (hidden_dim ** 0.5)
    lim2 = 1.0 / (ff_dim ** 0.5)
    # stored as (in_dim, out_dim) so the kernel computes x @ W + b
    w1 = jax.random.uniform(k1, (hidden_dim, ff_dim), dtype, -lim1, lim1)
    b1 = jax.random.uniform(k2, (1, ff_dim), dtype, -lim1, lim1)
    w2 = jax.random.uniform(k3, (ff_dim, hidden_dim), dtype, -lim2, lim2)
    b2 = jax.random.uniform(k4, (1, hidden_dim), dtype, -lim2, lim2)
    return w1, b1, w2, b2


if __name__ == "__main__":
    batch, seq, hidden_dim, ff_dim = 2, 8, 32, 64
    dropout_p = 0.1  # identity in eval mode

    key = jax.random.PRNGKey(0)
    kx, kp = jax.random.split(key)
    x = jax.random.normal(kx, (batch, seq, hidden_dim), dtype=jnp.float32)
    w1, b1, w2, b2 = init_params(kp, hidden_dim, ff_dim)

    # f32 path — bit-accurate vs. plain-JAX reference.
    y = feed_forward(x, w1, b1, w2, b2)
    y = jax.block_until_ready(y)

    ref = jnp.maximum(x.reshape(-1, hidden_dim) @ w1 + b1, 0.0) @ w2 + b2
    ref = ref.reshape(batch, seq, hidden_dim)
    assert y.shape == (batch, seq, hidden_dim)
    assert jnp.allclose(y, ref, atol=1e-5, rtol=1e-5)

    # bf16-operand path (MXU-friendly on v6e/v7x); f32 accumulation inside.
    y_bf16 = feed_forward(x, w1, b1, w2, b2, compute_dtype=jnp.bfloat16)
    y_bf16 = jax.block_until_ready(y_bf16)
    assert jnp.allclose(y_bf16, ref, atol=5e-2, rtol=5e-2)

    print("KERNEL_OK")
</pallas_src>

<mosaic_0001>
module attributes {stable_mosaic.version = 11 : i64} {
  func.func @ffn_kernel(%arg0: i32, %arg1: i32, %arg2: memref<16x32xf32, #tpu.memory_space<vmem>>, %arg3: memref<32x64xf32, #tpu.memory_space<vmem>>, %arg4: memref<1x64xf32, #tpu.memory_space<vmem>>, %arg5: memref<64x32xf32, #tpu.memory_space<vmem>>, %arg6: memref<1x32xf32, #tpu.memory_space<vmem>>, %arg7: memref<16x32xf32, #tpu.memory_space<vmem>>, %arg8: memref<16x64xf32, #tpu.memory_space<vmem>>, %arg9: memref<16x32xf32, #tpu.memory_space<vmem>>) attributes {dimension_semantics = [#tpu.dimension_semantics<parallel>, #tpu.dimension_semantics<arbitrary>], iteration_bounds = array<i64: 1, 1>, scalar_prefetch = 0 : i64, scratch_operands = 2 : i64, tpu.core_type = #tpu.core_type<tc>, window_params = [{transform_indices = @transform_0, window_bounds = array<i64: 16, 32>}, {transform_indices = @transform_1, window_bounds = array<i64: 32, 64>}, {transform_indices = @transform_2, window_bounds = array<i64: 1, 64>}, {transform_indices = @transform_3, window_bounds = array<i64: 64, 32>}, {pipeline_mode = #tpu.pipeline_mode<synchronous>, transform_indices = @transform_4, window_bounds = array<i64: 1, 32>}, {transform_indices = @transform_5, window_bounds = array<i64: 16, 32>}]} {
    %c0_i32 = arith.constant 0 : i32
    %0 = arith.cmpi eq, %arg1, %c0_i32 : i32
    %1 = arith.extui %0 : i1 to i32
    %c0_i32_0 = arith.constant 0 : i32
    %2 = arith.cmpi ne, %1, %c0_i32_0 : i32
    scf.if %2 {
      %cst_20 = arith.constant 0.000000e+00 : f32
      %21 = vector.broadcast %cst_20 : f32 to vector<16x32xf32>
      %c0_21 = arith.constant 0 : index
      %c0_22 = arith.constant 0 : index
      %22 = vector.load %arg9[%c0_21, %c0_22] : memref<16x32xf32, #tpu.memory_space<vmem>>, vector<16x32xf32>
      tpu.vector_store %arg9[%c0_21, %c0_22], %21 {strides = array<i32>} : memref<16x32xf32, #tpu.memory_space<vmem>>, vector<16x32xf32>,
    } else {
    }
    %c0 = arith.constant 0 : index
    %c0_1 = arith.constant 0 : index
    %3 = vector.load %arg2[%c0, %c0_1] : memref<16x32xf32, #tpu.memory_space<vmem>>, vector<16x32xf32>
    %c0_2 = arith.constant 0 : index
    %c0_3 = arith.constant 0 : index
    %4 = vector.load %arg3[%c0_2, %c0_3] : memref<32x64xf32, #tpu.memory_space<vmem>>, vector<32x64xf32>
    %cst = arith.constant dense<0.000000e+00> : vector<16x64xf32>
    %5 = tpu.matmul %3, %4, %cst {dimension_numbers = #tpu.dot_dimension_numbers<[1], [0], [0], [1], [0, 0, 1, 1], [], []>} : vector<16x32xf32>, vector<32x64xf32>, vector<16x64xf32> -> vector<16x64xf32>
    %c0_4 = arith.constant 0 : index
    %c0_5 = arith.constant 0 : index
    %6 = vector.load %arg4[%c0_4, %c0_5] : memref<1x64xf32, #tpu.memory_space<vmem>>, vector<1x64xf32>
    %7 = vector.broadcast %6 : vector<1x64xf32> to vector<16x64xf32>
    %8 = arith.addf %5, %7 : vector<16x64xf32>
    %cst_6 = arith.constant 0.000000e+00 : f32
    %9 = vector.broadcast %cst_6 : f32 to vector<16x64xf32>
    %10 = arith.maximumf %8, %9 : vector<16x64xf32>
    %c0_7 = arith.constant 0 : index
    %c0_8 = arith.constant 0 : index
    %11 = vector.load %arg8[%c0_7, %c0_8] : memref<16x64xf32, #tpu.memory_space<vmem>>, vector<16x64xf32>
    tpu.vector_store %arg8[%c0_7, %c0_8], %10 {strides = array<i32>} : memref<16x64xf32, #tpu.memory_space<vmem>>, vector<16x64xf32>,
    %c0_9 = arith.constant 0 : index
    %c0_10 = arith.constant 0 : index
    %12 = vector.load %arg9[%c0_9, %c0_10] : memref<16x32xf32, #tpu.memory_space<vmem>>, vector<16x32xf32>
    %c0_11 = arith.constant 0 : index
    %c0_12 = arith.constant 0 : index
    %13 = vector.load %arg8[%c0_11, %c0_12] : memref<16x64xf32, #tpu.memory_space<vmem>>, vector<16x64xf32>
    %c0_13 = arith.constant 0 : index
    %c0_14 = arith.constant 0 : index
    %14 = vector.load %arg5[%c0_13, %c0_14] : memref<64x32xf32, #tpu.memory_space<vmem>>, vector<64x32xf32>
    %cst_15 = arith.constant dense<0.000000e+00> : vector<16x32xf32>
    %15 = tpu.matmul %13, %14, %cst_15 {dimension_numbers = #tpu.dot_dimension_numbers<[1], [0], [0], [1], [0, 0, 1, 1], [], []>} : vector<16x64xf32>, vector<64x32xf32>, vector<16x32xf32> -> vector<16x32xf32>
    %16 = arith.addf %12, %15 : vector<16x32xf32>
    %c0_16 = arith.constant 0 : index
    %c0_17 = arith.constant 0 : index
    %17 = vector.load %arg9[%c0_16, %c0_17] : memref<16x32xf32, #tpu.memory_space<vmem>>, vector<16x32xf32>
    tpu.vector_store %arg9[%c0_16, %c0_17], %16 {strides = array<i32>} : memref<16x32xf32, #tpu.memory_space<vmem>>, vector<16x32xf32>,
    %c0_i32_18 = arith.constant 0 : i32
    %18 = arith.cmpi eq, %arg1, %c0_i32_18 : i32
    %19 = arith.extui %18 : i1 to i32
    %c0_i32_19 = arith.constant 0 : i32
    %20 = arith.cmpi ne, %19, %c0_i32_19 : i32
    scf.if %20 {
      %c0_20 = arith.constant 0 : index
      %c0_21 = arith.constant 0 : index
      %21 = vector.load %arg9[%c0_20, %c0_21] : memref<16x32xf32, #tpu.memory_space<vmem>>, vector<16x32xf32>
      %c0_22 = arith.constant 0 : index
      %c0_23 = arith.constant 0 : index
      %22 = vector.load %arg6[%c0_22, %c0_23] : memref<1x32xf32, #tpu.memory_space<vmem>>, vector<1x32xf32>
      %23 = vector.broadcast %22 : vector<1x32xf32> to vector<16x32xf32>
      %24 = arith.addf %21, %23 : vector<16x32xf32>
      %c0_24 = arith.constant 0 : index
      %c0_25 = arith.constant 0 : index
      %25 = vector.load %arg7[%c0_24, %c0_25] : memref<16x32xf32, #tpu.memory_space<vmem>>, vector<16x32xf32>
      tpu.vector_store %arg7[%c0_24, %c0_25], %24 {strides = array<i32>} : memref<16x32xf32, #tpu.memory_space<vmem>>, vector<16x32xf32>,
    } else {
    }
    return
  }
  func.func @transform_0(%arg0: i32, %arg1: i32) -> (i32, i32) {
    %c0_i32 = arith.constant 0 : i32
    %c0_i32_0 = arith.constant 0 : i32
    return %arg0, %c0_i32 : i32, i32
  }
  func.func @transform_1(%arg0: i32, %arg1: i32) -> (i32, i32) {
    %c0_i32 = arith.constant 0 : i32
    %c0_i32_0 = arith.constant 0 : i32
    return %c0_i32, %arg1 : i32, i32
  }
  func.func @transform_2(%arg0: i32, %arg1: i32) -> (i32, i32) {
    %c0_i32 = arith.constant 0 : i32
    %c0_i32_0 = arith.constant 0 : i32
    return %c0_i32, %arg1 : i32, i32
  }
  func.func @transform_3(%arg0: i32, %arg1: i32) -> (i32, i32) {
    %c0_i32 = arith.constant 0 : i32
    %c0_i32_0 = arith.constant 0 : i32
    return %arg1, %c0_i32 : i32, i32
  }
  func.func @transform_4(%arg0: i32, %arg1: i32) -> (i32, i32) {
    %c0_i32 = arith.constant 0 : i32
    %c0_i32_0 = arith.constant 0 : i32
    %c0_i32_1 = arith.constant 0 : i32
    return %c0_i32, %c0_i32_0 : i32, i32
  }
  func.func @transform_5(%arg0: i32, %arg1: i32) -> (i32, i32) {
    %c0_i32 = arith.constant 0 : i32
    %c0_i32_0 = arith.constant 0 : i32
    return %arg0, %c0_i32 : i32, i32
  }
}

</mosaic_0001>

<llo_original>
// kernel: tpu_custom_call.1
$region0: #{tpu_custom_call.1}
  #allocation0 [shape = 'u32[]', space=smem, size = 0x4, offset = 0x4, fixed_abs, tag = 'smem constant byte address 0x4 - core index']
  #allocation1 [shape = 'u32[144,128]{1,0:T(1,128)}', space=vmem, size = 0x12000, scoped, tag = 'internal scratch']
  #allocation2 [shape = 'f32[16,64]{1,0:T(8,128)}', space=vmem, size = 0x2000, scoped, tag = 'scratch operand']
  #allocation3 [shape = 'f32[16,32]{1,0:T(8,128)}', space=vmem, size = 0x2000, scoped, tag = 'scratch operand']
  %s0 = inlined_call_operand.vmem [shape: f32[16,32], index: 0, kind: input, shape index: {}]
  %s1 = inlined_call_operand.vmem [shape: f32[32,64], index: 1, kind: input, shape index: {}]
  %s2 = inlined_call_operand.vmem [shape: f32[1,64], index: 2, kind: input, shape index: {}]
  %s3 = inlined_call_operand.vmem [shape: f32[64,32], index: 3, kind: input, shape index: {}]
  %s4 = inlined_call_operand.vmem [shape: f32[1,32], index: 4, kind: input, shape index: {}]
  %s5 = inlined_call_operand.hbm [shape: f32[16,32], index: 5, kind: output, shape index: {}]
  %s6 = sld [smem:[#allocation0]]
  $region38: #{tpu_custom_call.1} parent=0
    _
  %s8 = ssub.s32 1, %s6
  %s9 = scalar_select 0, %s8, %s6
  $region1: #{tpu_custom_call.1} parent=0
    #allocation4 [shape = 'u8[8192]{0}', space=vmem, size = 0x2000, scoped, tag = 'output window, operand 0, single buffered']
    #allocation5 [shape = 's32[1]{0}', space=sflag, size = 0x4, scoped, tag = 'scoped memory for tpu_custom_call.1']
    %10 = vsyncpa [#allocation5], 0
    // Predicated region
    $region2: #{tpu_custom_call.1} parent=1 // pred_check
      _
    $region3: #{tpu_custom_call.1} parent=1 // pred_check_branch
      %12 = sbr.rel (0) target = $region5
    $region4: #{tpu_custom_call.1} parent=1 // pred_region
      _
    $region5: #{tpu_custom_call.1} parent=1 // pred_fallthru
      _
    // Predicated region
    $region6: #{tpu_custom_call.1} parent=1 // pred_check
      _
    $region7: #{tpu_custom_call.1} parent=1 // pred_check_branch
      %14 = sbr.rel (0) target = $region9
    $region8: #{tpu_custom_call.1} parent=1 // pred_region
      _
    $region9: #{tpu_custom_call.1} parent=1 // pred_fallthru
      _
    // Predicated region
    $region10: #{tpu_custom_call.1} parent=1 // pred_check
      _
    $region11: #{tpu_custom_call.1} parent=1 // pred_check_branch
      %16 = sbr.rel (0) target = $region13
    $region12: #{tpu_custom_call.1} parent=1 // pred_region
      _
    $region13: #{tpu_custom_call.1} parent=1 // pred_fallthru
      _
    // Predicated region
    $region14: #{tpu_custom_call.1} parent=1 // pred_check
      _
    $region15: #{tpu_custom_call.1} parent=1 // pred_check_branch
      %18 = sbr.rel (0) target = $region17
    $region16: #{tpu_custom_call.1} parent=1 // pred_region
      _
    $region17: #{tpu_custom_call.1} parent=1 // pred_fallthru
      _
    // Predicated region
    $region18: #{tpu_custom_call.1} parent=1 // pred_check
      _
    $region19: #{tpu_custom_call.1} parent=1 // pred_check_branch
      %20 = sbr.rel (0) target = $region21
    $region20: #{tpu_custom_call.1} parent=1 // pred_region
      _
    $region21: #{tpu_custom_call.1} parent=1 // pred_fallthru
      _
    %p21 = scmp.eq.s32.totalorder 0, 0
    // Predicated region
    $region22: #{tpu_custom_call.1} parent=1 // pred_check
      %p22 = pneg %p21
    $region23: #{tpu_custom_call.1} parent=1 // pred_check_branch
      %24 = sbr.rel (%p22) target = $region25
    $region24: #{tpu_custom_call.1} parent=1 // pred_region
      %vm25 = vcmask 261120
      %26 = vst.msk [vmem:[#allocation3] sm:$0xff] %vm25, 0.0
      %27 = vst.msk [vmem:[#allocation3 + $0x8] sm:$0xff] %vm25, 0.0
    $region25: #{tpu_custom_call.1} parent=1 // pred_fallthru
      _
    %v28 = vld [vmem:[%s0] sm:$0xff]
    %v29 = vld [vmem:[%s0 + $0x8] sm:$0xff]
    %v30 = vld [vmem:[%s1] sm:$0xff]
    %v31 = vld [vmem:[%s1 + $0x8] sm:$0xff]
    %v32 = vld [vmem:[%s1 + $0x10] sm:$0xff]
    %v33 = vld [vmem:[%s1 + $0x18] sm:$0xff]
    %v34 = vld [vmem:[%s2] sm:$0x1]
    %v36 = vlaneseq
    %v37 = vshrl.u32 %v36, 7
    %v38 = vsub.s32 0, %v37
    %v39 = vrot.slane %v34, %v38
    %vm41 = vcmask 261120
    %v43 = vsel %vm41, %v28, 0
    %v46 = vsel %vm41, %v29, 0
    %48 = vmatprep.subr.mxu0 0.0
    %49 = vmatpush1.msra.mxu0 0.0
    %50 = vmatprep.subr.mxu0 0.0
    %51 = vmatpush1.msra.mxu0 0.0
    %52 = vmatprep.subr.mxu0 0.0
    %53 = vmatpush1.msra.mxu0 0.0
    %54 = vmatprep.subr.mxu0 0.0
    %55 = vmatpush1.msra.mxu0 0.0
    %56 = vmatprep.subr.mxu0 0.0
    %57 = vmatpush1.msra.mxu0 0.0
    %58 = vmatprep.subr.mxu0 0.0
    %59 = vmatpush1.msra.mxu0 0.0
    %60 = vmatprep.subr.mxu0 0.0
    %61 = vmatpush1.msra.mxu0 0.0
    %62 = vmatprep.subr.mxu0 0.0
    %63 = vmatpush1.msra.mxu0 0.0
    %64 = vmatprep.subr.mxu0 0.0
    %65 = vmatpush1.msra.mxu0 0.0
    %66 = vmatprep.subr.mxu0 0.0
    %67 = vmatpush1.msra.mxu0 0.0
    %68 = vmatprep.subr.mxu0 0.0
    %69 = vmatpush1.msra.mxu0 0.0
    %70 = vmatprep.subr.mxu0 0.0
    %71 = vmatpush1.msra.mxu0 0.0
    %72 = vmatprep.subr.mxu0 0.0
    %73 = vmatpush1.msra.mxu0 %v33
    %74 = vmatprep.subr.mxu0 0.0
    %75 = vmatpush1.msra.mxu0 %v32
    %76 = vmatprep.subr.mxu0 0.0
    %77 = vmatpush1.msra.mxu0 %v31
    %78 = vmatprep.subr.mxu0 0.0
    %79 = vmatpush1.msra.mxu0 %v30
    %80 = vmatprep.subr.mxu0 0.0
    %81 = vmatpush2.msra.mxu0 0.0
    %82 = vmatprep.subr.mxu0 0.0
    %83 = vmatpush2.msra.mxu0 0.0
    %84 = vmatprep.subr.mxu0 0.0
    %85 = vmatpush2.msra.mxu0 0.0
    %86 = vmatprep.subr.mxu0 0.0
    %87 = vmatpush2.msra.mxu0 0.0
    %88 = vmatprep.subr.mxu0 0.0
    %89 = vmatpush2.msra.mxu0 0.0
    %90 = vmatprep.subr.mxu0 0.0
    %91 = vmatpush2.msra.mxu0 0.0
    %92 = vmatprep.subr.mxu0 0.0
    %93 = vmatpush2.msra.mxu0 0.0
    %94 = vmatprep.subr.mxu0 0.0
    %95 = vmatpush2.msra.mxu0 0.0
    %96 = vmatprep.subr.mxu0 0.0
    %97 = vmatpush2.msra.mxu0 0.0
    %98 = vmatprep.subr.mxu0 0.0
    %99 = vmatpush2.msra.mxu0 0.0
    %100 = vmatprep.subr.mxu0 0.0
    %101 = vmatpush2.msra.mxu0 0.0
    %102 = vmatprep.subr.mxu0 0.0
    %103 = vmatpush2.msra.mxu0 0.0
    %104 = vmatprep.subr.mxu0 0.0
    %105 = vmatpush2.msra.mxu0 0.0
    %106 = vmatprep.subr.mxu0 0.0
    %107 = vmatpush2.msra.mxu0 0.0
    %108 = vmatprep.subr.mxu0 0.0
    %109 = vmatpush2.msra.mxu0 0.0
    %110 = vmatprep.subr.mxu0 0.0
    %111 = vmatpush2.msra.mxu0 0.0
    %112 = vmatprep.mubr.f32.mxu0 0.0
    %113 = vmatmul.mubr.f32.gmra.mxu0 %v43
    %v114 = vpop.f32.mrf.mxu0
    %v115 = vadd.f32 %v39, %v114
    %v116 = vpop.f32.mrf.mxu0
    %117 = vmatprep.mubr.f32.mxu0 0.0
    %118 = vmatmul.mubr.f32.gmra.mxu0 %v46
    %v119 = vpop.f32.mrf.mxu0
    %v120 = vadd.f32 %v39, %v119
    %v121 = vpop.f32.mrf.mxu0
    %122 = vdwg.mxu0
    %v123 = vmax.f32 %v115, 0.0
    %v124 = vmax.f32 %v120, 0.0
    %vm125 = vcmask 523264
    %126 = vst.msk [vmem:[#allocation2] sm:$0xff] %vm125, %v123
    %127 = vst.msk [vmem:[#allocation2 + $0x8] sm:$0xff] %vm125, %v124
    %v128 = vld [vmem:[#allocation3] sm:$0xff]
    %v129 = vld [vmem:[#allocation3 + $0x8] sm:$0xff]
    %v130 = vld [vmem:[#allocation2] sm:$0xff]
    %v131 = vld [vmem:[#allocation2 + $0x8] sm:$0xff]
    %v132 = vld [vmem:[%s3] sm:$0xff]
    %v133 = vld [vmem:[%s3 + $0x8] sm:$0xff]
    %v134 = vld [vmem:[%s3 + $0x10] sm:$0xff]
    %v135 = vld [vmem:[%s3 + $0x18] sm:$0xff]
    %v136 = vld [vmem:[%s3 + $0x20] sm:$0xff]
    %v137 = vld [vmem:[%s3 + $0x28] sm:$0xff]
    %v138 = vld [vmem:[%s3 + $0x30] sm:$0xff]
    %v139 = vld [vmem:[%s3 + $0x38] sm:$0xff]
    %v141 = vsel %vm125, %v130, 0
    %v144 = vsel %vm125, %v131, 0
    %146 = vmatprep.subr.mxu0 0.0
    %147 = vmatpush1.msra.mxu0 0.0
    %148 = vmatprep.subr.mxu0 0.0
    %149 = vmatpush1.msra.mxu0 0.0
    %150 = vmatprep.subr.mxu0 0.0
    %151 = vmatpush1.msra.mxu0 0.0
    %152 = vmatprep.subr.mxu0 0.0
    %153 = vmatpush1.msra.mxu0 0.0
    %154 = vmatprep.subr.mxu0 0.0
    %155 = vmatpush1.msra.mxu0 0.0
    %156 = vmatprep.subr.mxu0 0.0
    %157 = vmatpush1.msra.mxu0 0.0
    %158 = vmatprep.subr.mxu0 0.0
    %159 = vmatpush1.msra.mxu0 0.0
    %160 = vmatprep.subr.mxu0 0.0
    %161 = vmatpush1.msra.mxu0 0.0
    %162 = vmatprep.subr.mxu0 0.0
    %163 = vmatpush1.msra.mxu0 %v139
    %164 = vmatprep.subr.mxu0 0.0
    %165 = vmatpush1.msra.mxu0 %v138
    %166 = vmatprep.subr.mxu0 0.0
    %167 = vmatpush1.msra.mxu0 %v137
    %168 = vmatprep.subr.mxu0 0.0
    %169 = vmatpush1.msra.mxu0 %v136
    %170 = vmatprep.subr.mxu0 0.0
    %171 = vmatpush1.msra.mxu0 %v135
    %172 = vmatprep.subr.mxu0 0.0
    %173 = vmatpush1.msra.mxu0 %v134
    %174 = vmatprep.subr.mxu0 0.0
    %175 = vmatpush1.msra.mxu0 %v133
    %176 = vmatprep.subr.mxu0 0.0
    %177 = vmatpush1.msra.mxu0 %v132
    %178 = vmatprep.subr.mxu0 0.0
    %179 = vmatpush2.msra.mxu0 0.0
    %180 = vmatprep.subr.mxu0 0.0
    %181 = vmatpush2.msra.mxu0 0.0
    %182 = vmatprep.subr.mxu0 0.0
    %183 = vmatpush2.msra.mxu0 0.0
    %184 = vmatprep.subr.mxu0 0.0
    %185 = vmatpush2.msra.mxu0 0.0
    %186 = vmatprep.subr.mxu0 0.0
    %187 = vmatpush2.msra.mxu0 0.0
    %188 = vmatprep.subr.mxu0 0.0
    %189 = vmatpush2.msra.mxu0 0.0
    %190 = vmatprep.subr.mxu0 0.0
    %191 = vmatpush2.msra.mxu0 0.0
    %192 = vmatprep.subr.mxu0 0.0
    %193 = vmatpush2.msra.mxu0 0.0
    %194 = vmatprep.subr.mxu0 0.0
    %195 = vmatpush2.msra.mxu0 0.0
    %196 = vmatprep.subr.mxu0 0.0
    %197 = vmatpush2.msra.mxu0 0.0
    %198 = vmatprep.subr.mxu0 0.0
    %199 = vmatpush2.msra.mxu0 0.0
    %200 = vmatprep.subr.mxu0 0.0
    %201 = vmatpush2.msra.mxu0 0.0
    %202 = vmatprep.subr.mxu0 0.0
    %203 = vmatpush2.msra.mxu0 0.0
    %204 = vmatprep.subr.mxu0 0.0
    %205 = vmatpush2.msra.mxu0 0.0
    %206 = vmatprep.subr.mxu0 0.0
    %207 = vmatpush2.msra.mxu0 0.0
    %208 = vmatprep.subr.mxu0 0.0
    %209 = vmatpush2.msra.mxu0 0.0
    %210 = vmatprep.mubr.f32.mxu0 0.0
    %211 = vmatmul.mubr.f32.gmra.mxu0 %v141
    %v212 = vpop.f32.mrf.mxu0
    %v213 = vadd.f32 0.0, %v212
    %v214 = vpop.f32.mrf.mxu0
    %215 = vmatprep.mubr.f32.mxu0 0.0
    %216 = vmatmul.mubr.f32.gmra.mxu0 %v144
    %v217 = vpop.f32.mrf.mxu0
    %v218 = vadd.f32 0.0, %v217
    %v219 = vpop.f32.mrf.mxu0
    %220 = vdwg.mxu0
    %v221 = vadd.f32 %v128, %v213
    %v222 = vadd.f32 %v129, %v218
    %223 = vst.msk [vmem:[#allocation3] sm:$0xff] %vm41, %v221
    %224 = vst.msk [vmem:[#allocation3 + $0x8] sm:$0xff] %vm41, %v222
    // Predicated region
    $region26: #{tpu_custom_call.1} parent=1 // pred_check
      %p225 = pneg %p21
    $region27: #{tpu_custom_call.1} parent=1 // pred_check_branch
      %227 = sbr.rel (%p225) target = $region29
    $region28: #{tpu_custom_call.1} parent=1 // pred_region
      %v228 = vld [vmem:[#allocation3] sm:$0xff]
      %v229 = vld [vmem:[#allocation3 + $0x8] sm:$0xff]
      %v230 = vld [vmem:[%s4] sm:$0x1]
      %v232 = vlaneseq
      %v233 = vshrl.u32 %v232, 7
      %v234 = vsub.s32 0, %v233
      %v235 = vrot.slane %v230, %v234
      %v237 = vadd.f32 %v228, %v235
      %v238 = vadd.f32 %v229, %v235
      %239 = vst.msk [vmem:[#allocation4] sm:$0xff] %vm41, %v237
      %240 = vst.msk [vmem:[#allocation4 + $0x8] sm:$0xff] %vm41, %v238
    $region29: #{tpu_custom_call.1} parent=1 // pred_fallthru
      _
    // Predicated region
    $region30: #{tpu_custom_call.1} parent=1 // pred_check
      _
    $region31: #{tpu_custom_call.1} parent=1 // pred_check_branch
      %242 = sbr.rel (0) target = $region33
    $region32: #{tpu_custom_call.1} parent=1 // pred_region
      %s244 = ssub.s32 256, 256
      %245 = vsyncadd [#allocation5], %s244
      %s246 = sshll.u32 [#allocation4], 4
      %s247 = int_to_ptr.vmem [resolvable:$true] %s246
      %252 = dma.vmem_to_hbm [thread:$0]  %s247, 256, %s5, [#allocation5], 128, 128, 8
    $region33: #{tpu_custom_call.1} parent=1 // pred_fallthru
      _
    // Predicated region
    $region34: #{tpu_custom_call.1} parent=1 // pred_check
      _
    $region35: #{tpu_custom_call.1} parent=1 // pred_check_branch
      %254 = sbr.rel (0) target = $region37
    $region36: #{tpu_custom_call.1} parent=1 // pred_region
      %255 = dma.done [#allocation5], 256
    $region37: #{tpu_custom_call.1} parent=1 // pred_fallthru
      _
    %256 = vsyncpa [#allocation5], 1

</llo_original>
